<compile_context>
chip_gen: v7x
topology: tpu7x:2x2x1
jax: 0.10.0
libtpu: 0.0.40
codegen_flags: <defaults>
</compile_context>

<pallas_src>
import functools

import jax
import jax.numpy as jnp
import numpy as np
from jax.experimental import pallas as pl
from jax.experimental.pallas import tpu as pltpu

_MASK_FILL = -10000.0  # TE's attention_mask_func fill value


def _softmax_body(x_ref, m_ref, o_ref, *, scale, causal, diag, sk_actual):
    # x_ref: (1, 1, TSQ, sk_pad) block of scores
    # m_ref: None, or (1, 1, 1, sk_pad) / (1, 1, TSQ, sk_pad) int8 mask block
    x = x_ref[...].astype(jnp.float32) * jnp.float32(scale)
    tsq, sk_pad = x.shape[-2], x.shape[-1]

    if m_ref is not None:
        # broadcast over the sublane (row) dim if the mask block has 1 row
        x = jnp.where(m_ref[...] != 0, jnp.float32(_MASK_FILL), x)

    if causal:
        q0 = pl.program_id(2) * tsq
        rows = jax.lax.broadcasted_iota(jnp.int32, (tsq, sk_pad), 0) + q0
        cols = jax.lax.broadcasted_iota(jnp.int32, (tsq, sk_pad), 1)
        cmask = (cols >= rows + diag)[None, None, :, :]
        x = jnp.where(cmask, jnp.float32(_MASK_FILL), x)

    if sk_pad > sk_actual:
        # pad key columns get exactly zero probability (even for all-masked rows)
        cols = jax.lax.broadcasted_iota(jnp.int32, (tsq, sk_pad), 1)
        pad = (cols >= sk_actual)[None, None, :, :]
        x = jnp.where(pad, -jnp.inf, x)

    x_max = jnp.max(x, axis=-1, keepdims=True)
    e = jnp.exp(x - x_max)
    denom = jnp.sum(e, axis=-1, keepdims=True)
    inv = pl.reciprocal(denom, approx=True)   # EUP; broadcast-multiply below
    o_ref[...] = (e * inv).astype(o_ref.dtype)


def _masked_kernel(x_ref, m_ref, o_ref, *, scale, causal, diag, sk_actual):
    _softmax_body(x_ref, m_ref, o_ref, scale=scale, causal=causal,
                  diag=diag, sk_actual=sk_actual)


def _unmasked_kernel(x_ref, o_ref, *, scale, causal, diag, sk_actual):
    _softmax_body(x_ref, None, o_ref, scale=scale, causal=causal,
                  diag=diag, sk_actual=sk_actual)


def _pick_tsq(sq, row_align):
    """Largest tile <= 256 rows that divides sq and respects layout alignment."""
    if sq <= 256:
        return sq
    t = 256 - (256 % row_align)
    while t >= row_align:
        if sq % t == 0:
            return t
        t -= row_align
    return sq  # fall back to the full dimension (always layout-legal)


def fused_scale_mask_softmax(inp, mask, attn_mask_type="padding", scale=None):
    """JAX/Pallas equivalent of FusedScaleMaskSoftmax.forward.

    inp : [b, np, sq, sk] bf16/fp16/fp32 attention scores
    mask: None, or boolean [1 or b, 1, sq, sk] (per-row mask) or
          [1 or b, 1, 1, sk] (key-padding mask); True = masked out
    """
    assert inp.ndim == 4
    b, h, sq, sk = inp.shape
    scale = 1.0 if scale is None else float(scale)

    causal = attn_mask_type in ("causal", "causal_bottom_right")
    diag = (sk - sq + 1) if "bottom_right" in attn_mask_type else 1
    use_mask = (mask is not None) and (attn_mask_type != "no_mask")

    # ----- pad sk up to a multiple of 128 for lane-dense loads/stores
    sk_pad = -(-sk // 128) * 128
    x = inp
    if sk_pad != sk:
        x = jnp.pad(inp, ((0, 0), (0, 0), (0, 0), (0, sk_pad - sk)))

    # ----- mask plumbing
    mask_i8 = None
    full_rows = False
    mb = 1
    if use_mask:
        assert mask.ndim == 4 and mask.shape[1] == 1, "mask must be [b|1, 1, sq|1, sk]"
        mb, _, msq, msk = mask.shape
        assert mb in (1, b), "mask batch dim must be 1 or b"
        assert msk == sk, "mask key length must match scores"
        assert msq in (1, sq), "mask query dim must be 1 (key-padding) or sq"
        full_rows = (msq == sq)
        mask_i8 = mask.astype(jnp.int8)
        if sk_pad != sk:
            mask_i8 = jnp.pad(mask_i8, ((0, 0), (0, 0), (0, 0), (0, sk_pad - sk)))

    # ----- sq tiling (independent rows; reduction is only along sk)
    row_align = 32 if (use_mask and full_rows) else 8  # int8 mask tiles want 32 rows
    tsq = _pick_tsq(sq, row_align)
    n_q = sq // tsq

    def x_map(i, j, q):
        return (i, j, q, 0)

    in_specs = [pl.BlockSpec((1, 1, tsq, sk_pad), x_map)]
    args = [x]

    if use_mask:
        if full_rows:
            if mb == b:
                m_map = lambda i, j, q: (i, 0, q, 0)
            else:
                m_map = lambda i, j, q: (0, 0, q, 0)
            m_block = (1, 1, tsq, sk_pad)
        else:
            if mb == b:
                m_map = lambda i, j, q: (i, 0, 0, 0)
            else:
                m_map = lambda i, j, q: (0, 0, 0, 0)
            m_block = (1, 1, 1, sk_pad)
        in_specs.append(pl.BlockSpec(m_block, m_map))
        args.append(mask_i8)

    kernel = functools.partial(
        _masked_kernel if use_mask else _unmasked_kernel,
        scale=scale, causal=causal, diag=diag, sk_actual=sk)

    out = pl.pallas_call(
        kernel,
        out_shape=jax.ShapeDtypeStruct((b, h, sq, sk_pad), inp.dtype),
        grid=(b, h, n_q),
        in_specs=in_specs,
        out_specs=pl.BlockSpec((1, 1, tsq, sk_pad), x_map),
        compiler_params=pltpu.CompilerParams(
            dimension_semantics=("parallel", "parallel", "parallel"),
            vmem_limit_bytes=32 * 1024 * 1024,
        ),
    )(*args)

    if sk_pad != sk:
        out = out[..., :sk]
    return out


def _reference(inp, mask, attn_mask_type, scale):
    # Pure-JAX re-implementation of forward_torch_softmax for checking.
    x = inp.astype(jnp.float32)
    if scale is not None:
        x = x * scale
    b, h, sq, sk = inp.shape
    if attn_mask_type in ("causal", "causal_bottom_right"):
        diag = sk - sq + 1 if "bottom_right" in attn_mask_type else 1
        causal = jnp.triu(jnp.ones((sq, sk), dtype=jnp.bool_), k=diag)[None, None]
        mask = causal if mask is None else jnp.logical_or(mask, causal)
    if mask is not None and attn_mask_type != "no_mask":
        x = jnp.where(mask, _MASK_FILL, x)
    p = jax.nn.softmax(x, axis=-1)
    return p.astype(inp.dtype)


# TODO(synk): backward pass (scaled_masked_softmax_backward) not implemented; forward only.

if __name__ == "__main__":
    key = jax.random.PRNGKey(0)
    b, h, sq, sk = 2, 4, 8, 32
    k1, k2, k3 = jax.random.split(key, 3)

    inp = jax.random.normal(k1, (b, h, sq, sk), dtype=jnp.float32).astype(jnp.bfloat16)
    # full per-row padding mask: True = masked-out positions
    mask_full = jax.random.uniform(k2, (b, 1, sq, sk)) > 0.7
    # key-padding mask (constant along sq): the common TE layout [b, 1, 1, sk]
    mask_kpad = jax.random.uniform(k3, (b, 1, 1, sk)) > 0.7

    scale = 0.125

    out_pad = fused_scale_mask_softmax(inp, mask_full, "padding", scale)
    out_kpad = fused_scale_mask_softmax(inp, mask_kpad, "padding", scale)
    out_causal = fused_scale_mask_softmax(inp, mask_full, "causal", scale)
    out_causal_only = fused_scale_mask_softmax(inp, None, "causal", scale)
    out_nomask = fused_scale_mask_softmax(inp, None, "no_mask", scale)

    jax.block_until_ready((out_pad, out_kpad, out_causal, out_causal_only, out_nomask))

    checks = [
        (out_pad, _reference(inp, mask_full, "padding", scale)),
        (out_kpad, _reference(inp, mask_kpad, "padding", scale)),
        (out_causal, _reference(inp, mask_full, "causal", scale)),
        (out_causal_only, _reference(inp, None, "causal", scale)),
        (out_nomask, _reference(inp, None, "no_mask", scale)),
    ]
    for got, ref in checks:
        np.testing.assert_allclose(np.asarray(got, np.float32),
                                   np.asarray(ref, np.float32),
                                   atol=2e-2, rtol=2e-2)

    print("KERNEL_OK")
</pallas_src>

<mosaic_0001>
module attributes {stable_mosaic.version = 11 : i64} {
  func.func @_masked_kernel(%arg0: i32, %arg1: i32, %arg2: i32, %arg3: memref<1x1x8x128xbf16, #tpu.memory_space<vmem>>, %arg4: memref<1x1x8x128xi8, #tpu.memory_space<vmem>>, %arg5: memref<1x1x8x128xbf16, #tpu.memory_space<vmem>>) attributes {dimension_semantics = [#tpu.dimension_semantics<parallel>, #tpu.dimension_semantics<parallel>, #tpu.dimension_semantics<parallel>], iteration_bounds = array<i64: 2, 4, 1>, scalar_prefetch = 0 : i64, scratch_operands = 0 : i64, tpu.core_type = #tpu.core_type<tc>, window_params = [{transform_indices = @transform_0, window_bounds = array<i64: 1, 1, 8, 128>}, {transform_indices = @transform_1, window_bounds = array<i64: 1, 1, 8, 128>}, {transform_indices = @transform_2, window_bounds = array<i64: 1, 1, 8, 128>}]} {
    %c0 = arith.constant 0 : index
    %c0_0 = arith.constant 0 : index
    %c0_1 = arith.constant 0 : index
    %c0_2 = arith.constant 0 : index
    %0 = vector.load %arg3[%c0, %c0_0, %c0_1, %c0_2] : memref<1x1x8x128xbf16, #tpu.memory_space<vmem>>, vector<1x1x8x128xbf16>
    %1 = arith.extf %0 : vector<1x1x8x128xbf16> to vector<1x1x8x128xf32>
    %cst = arith.constant 1.250000e-01 : f32
    %2 = vector.broadcast %cst : f32 to vector<1x1x8x128xf32>
    %3 = arith.mulf %1, %2 : vector<1x1x8x128xf32>
    %c0_3 = arith.constant 0 : index
    %c0_4 = arith.constant 0 : index
    %c0_5 = arith.constant 0 : index
    %c0_6 = arith.constant 0 : index
    %4 = vector.load %arg4[%c0_3, %c0_4, %c0_5, %c0_6] : memref<1x1x8x128xi8, #tpu.memory_space<vmem>>, vector<1x1x8x128xi8>
    %c0_i8 = arith.constant 0 : i8
    %5 = vector.broadcast %c0_i8 : i8 to vector<1x1x8x128xi8>
    %6 = arith.cmpi ne, %4, %5 : vector<1x1x8x128xi8>
    %cst_7 = arith.constant -1.000000e+04 : f32
    %7 = vector.broadcast %cst_7 : f32 to vector<1x1x8x128xf32>
    %8 = arith.select %6, %7, %3 : vector<1x1x8x128xi1>, vector<1x1x8x128xf32>
    %9 = tpu.iota {dimensions = array<i32: 1>} : vector<8x128xi32>
    %c32_i32 = arith.constant 32 : i32
    %10 = vector.broadcast %c32_i32 : i32 to vector<8x128xi32>
    %11 = arith.cmpi sge, %9, %10 : vector<8x128xi32>
    %12 = vector.shape_cast %11 : vector<8x128xi1> to vector<1x1x8x128xi1>
    %cst_8 = arith.constant 0xFF800000 : f32
    %13 = vector.broadcast %cst_8 : f32 to vector<1x1x8x128xf32>
    %14 = arith.select %12, %13, %8 : vector<1x1x8x128xi1>, vector<1x1x8x128xf32>
    %cst_9 = arith.constant dense<0xFF800000> : vector<1x1x8xf32>
    %15 = vector.multi_reduction <maximumf>, %14, %cst_9 [3] : vector<1x1x8x128xf32> to vector<1x1x8xf32>
    %16 = vector.shape_cast %15 : vector<1x1x8xf32> to vector<1x1x8x1xf32>
    %17 = vector.broadcast %16 : vector<1x1x8x1xf32> to vector<1x1x8x128xf32>
    %18 = arith.subf %14, %17 : vector<1x1x8x128xf32>
    %19 = math.exp %18 : vector<1x1x8x128xf32>
    %cst_10 = arith.constant dense<0.000000e+00> : vector<1x1x8xf32>
    %20 = vector.multi_reduction <add>, %19, %cst_10 [3] : vector<1x1x8x128xf32> to vector<1x1x8xf32>
    %21 = vector.shape_cast %20 : vector<1x1x8xf32> to vector<1x1x8x1xf32>
    %22 = tpu.reciprocal %21 {approx = true} : vector<1x1x8x1xf32> -> vector<1x1x8x1xf32>
    %23 = vector.broadcast %22 : vector<1x1x8x1xf32> to vector<1x1x8x128xf32>
    %24 = arith.mulf %19, %23 : vector<1x1x8x128xf32>
    %25 = arith.truncf %24 : vector<1x1x8x128xf32> to vector<1x1x8x128xbf16>
    %c0_11 = arith.constant 0 : index
    %c0_12 = arith.constant 0 : index
    %c0_13 = arith.constant 0 : index
    %c0_14 = arith.constant 0 : index
    %26 = vector.load %arg5[%c0_11, %c0_12, %c0_13, %c0_14] : memref<1x1x8x128xbf16, #tpu.memory_space<vmem>>, vector<1x1x8x128xbf16>
    tpu.vector_store %arg5[%c0_11, %c0_12, %c0_13, %c0_14], %25 {strides = array<i32>} : memref<1x1x8x128xbf16, #tpu.memory_space<vmem>>, vector<1x1x8x128xbf16>,
    return
  }
  func.func @transform_0(%arg0: i32, %arg1: i32, %arg2: i32) -> (i32, i32, i32, i32) {
    %c0_i32 = arith.constant 0 : i32
    %c0_i32_0 = arith.constant 0 : i32
    return %arg0, %arg1, %arg2, %c0_i32 : i32, i32, i32, i32
  }
  func.func @transform_1(%arg0: i32, %arg1: i32, %arg2: i32) -> (i32, i32, i32, i32) {
    %c0_i32 = arith.constant 0 : i32
    %c0_i32_0 = arith.constant 0 : i32
    %c0_i32_1 = arith.constant 0 : i32
    return %arg0, %c0_i32, %arg2, %c0_i32_0 : i32, i32, i32, i32
  }
  func.func @transform_2(%arg0: i32, %arg1: i32, %arg2: i32) -> (i32, i32, i32, i32) {
    %c0_i32 = arith.constant 0 : i32
    %c0_i32_0 = arith.constant 0 : i32
    return %arg0, %arg1, %arg2, %c0_i32 : i32, i32, i32, i32
  }
}

</mosaic_0001>

<llo_original>
// kernel: tpu_custom_call.1
$region0: #{tpu_custom_call.1}
  #allocation0 [shape = 'u32[]', space=smem, size = 0x4, offset = 0x4, fixed_abs, tag = 'smem constant byte address 0x4 - core index']
  #allocation1 [shape = 'u32[144,128]{1,0:T(1,128)}', space=vmem, size = 0x12000, scoped, tag = 'internal scratch']
  %s0 = inlined_call_operand.hbm [shape: bf16[2,4,8,128], index: 0, kind: input, shape index: {}]
  %s1 = inlined_call_operand.hbm [shape: s8[2,1,8,128], index: 1, kind: input, shape index: {}]
  %s2 = inlined_call_operand.hbm [shape: bf16[2,4,8,128], index: 2, kind: output, shape index: {}]
  %s3 = sld [smem:[#allocation0]]
  $region49: #{tpu_custom_call.1} parent=0
    _
  %s5 = ssub.s32 1, %s3
  %s6 = scalar_select 0, %s5, %s3
  $region1: #{tpu_custom_call.1} parent=0
    #allocation2 [shape = 'u8[4096]{0}', space=vmem, size = 0x1000, scoped, tag = 'input window, operand 0']
    #allocation3 [shape = 's32[2]{0}', space=sflag, size = 0x8, scoped, tag = 'scoped memory for tpu_custom_call.1']
    #allocation4 [shape = 's32[2]{0}', space=sflag, size = 0x8, scoped, tag = 'scoped memory for tpu_custom_call.1']
    #allocation5 [shape = 'u8[2048]{0}', space=vmem, size = 0x800, scoped, tag = 'input window, operand 1']
    #allocation6 [shape = 's32[2]{0}', space=sflag, size = 0x8, scoped, tag = 'scoped memory for tpu_custom_call.1']
    #allocation7 [shape = 'u8[4096]{0}', space=vmem, size = 0x1000, scoped, tag = 'output window, operand 0']
    %7 = vsyncpa [#allocation3], 0
    %s8 = scalar_lea.sflag [#allocation3], 1
    %9 = vsyncpa %s8, 0
    %10 = vsyncpa [#allocation6], 0
    %s11 = scalar_lea.sflag [#allocation6], 1
    %12 = vsyncpa %s11, 0
    %13 = vsyncpa [#allocation4], 0
    %s14 = scalar_lea.sflag [#allocation4], 1
    %15 = vsyncpa %s14, 0
    loop: start=0, step=1, limit=10
    $region2: #{tpu_custom_call.1} parent=1 // loop_pre_header
      _
    $region3: #{tpu_custom_call.1} parent=1 // loop_header
      %s17 = sphi 0, %s21
      %p18 = scmp.ge.s32.totalorder %s17, 10
      %s24 = sphi 0, %s43
      %s25 = sphi 0, %s39
      %s26 = sphi 0, %s35
      %s27 = sphi 0, %s24
      %s28 = sphi 0, %s25
      %s29 = sphi 0, %s26
      %s30 = sphi 0, %s27
      %s31 = sphi 0, %s28
      %s32 = sphi 0, %s29
      %s50 = sphi 0, %s52
      %s53 = sphi 0, %s50
      %s54 = sphi 0, %s53
      %s70 = sphi 0, %s54
      %s78 = sphi 0, %s80
      %s81 = sphi 0, %s78
      %s82 = sphi 0, %s81
      %s98 = sphi 0, %s82
      %s108 = sphi 0, %s110
      %s111 = sphi 0, %s108
      %s112 = sphi 0, %s111
      %s128 = sphi 0, %s112
    $region4: #{tpu_custom_call.1} parent=1 // loop_header_branch
      %20 = sbr.rel (%p18) target = $region8
    $region5: #{tpu_custom_call.1} parent=1 // loop_body
      %s22 = ssub.s32 %s17, 1
      %s23 = ssub.s32 %s17, 2
      %s33 = sadd.s32 1, %s26
      %p34 = scmp.ge.s32.totalorder %s33, 1
      %s35 = scalar_select %p34, 0, %s33
      %s36 = sadd.s32 1, %s25
      %s37 = scalar_select %p34, %s36, %s25
      %p38 = scmp.ge.s32.totalorder %s37, 4
      %s39 = scalar_select %p38, 0, %s37
      %s40 = sadd.s32 1, %s24
      %s41 = scalar_select %p38, %s40, %s24
      %p42 = scmp.ge.s32.totalorder %s41, 2
      %s43 = scalar_select %p42, 0, %s41
      %s44 = ssub.s32 %s24, %s43
      %s45 = ssub.s32 %s25, %s39
      %s46 = sor.u32 %s44, %s45
      %s47 = ssub.s32 %s26, %s35
      %s48 = sor.u32 %s46, %s47
      %p49 = scmp.eq.s32.totalorder %s48, 0
      %s51 = sadd.s32 %s50, 1
      %s52 = scalar_select %p49, %s50, %s51
      %p55 = pneg %p49
      %p56 = scmp.eq.s32.totalorder %s17, 7
      %p57 = por %p55, %p56
      %p58 = scmp.ne.s32.totalorder %s50, %s53
      %p59 = scmp.eq.s32.totalorder %s17, 0
      %p60 = por %p58, %p59
      %p61 = scmp.ne.s32.totalorder %s50, %s53
      %p62 = scmp.eq.s32.totalorder %s22, 7
      %p63 = por %p61, %p62
      %p64 = scmp.ne.s32.totalorder %s53, %s54
      %p65 = scmp.eq.s32.totalorder %s22, 0
      %p66 = por %p64, %p65
      %p67 = scmp.ne.s32.totalorder %s53, %s54
      %p68 = scmp.eq.s32.totalorder %s23, 7
      %p69 = por %p67, %p68
      %p71 = scmp.ne.s32.totalorder %s54, %s70
      %p72 = scmp.eq.s32.totalorder %s23, 0
      %p73 = por %p71, %p72
      %s74 = ssub.s32 %s24, %s43
      %s75 = ssub.s32 %s26, %s35
      %s76 = sor.u32 %s74, %s75
      %p77 = scmp.eq.s32.totalorder %s76, 0
      %s79 = sadd.s32 %s78, 1
      %s80 = scalar_select %p77, %s78, %s79
      %p83 = pneg %p77
      %p84 = scmp.eq.s32.totalorder %s17, 7
      %p85 = por %p83, %p84
      %p86 = scmp.ne.s32.totalorder %s78, %s81
      %p87 = scmp.eq.s32.totalorder %s17, 0
      %p88 = por %p86, %p87
      %p89 = scmp.ne.s32.totalorder %s78, %s81
      %p90 = scmp.eq.s32.totalorder %s22, 7
      %p91 = por %p89, %p90
      %p92 = scmp.ne.s32.totalorder %s81, %s82
      %p93 = scmp.eq.s32.totalorder %s22, 0
      %p94 = por %p92, %p93
      %p95 = scmp.ne.s32.totalorder %s81, %s82
      %p96 = scmp.eq.s32.totalorder %s23, 7
      %p97 = por %p95, %p96
      %p99 = scmp.ne.s32.totalorder %s82, %s98
      %p100 = scmp.eq.s32.totalorder %s23, 0
      %p101 = por %p99, %p100
      %s102 = ssub.s32 %s24, %s43
      %s103 = ssub.s32 %s25, %s39
      %s104 = sor.u32 %s102, %s103
      %s105 = ssub.s32 %s26, %s35
      %s106 = sor.u32 %s104, %s105
      %p107 = scmp.eq.s32.totalorder %s106, 0
      %s109 = sadd.s32 %s108, 1
      %s110 = scalar_select %p107, %s108, %s109
      %p113 = pneg %p107
      %p114 = scmp.eq.s32.totalorder %s17, 7
      %p115 = por %p113, %p114
      %p116 = scmp.ne.s32.totalorder %s108, %s111
      %p117 = scmp.eq.s32.totalorder %s17, 0
      %p118 = por %p116, %p117
      %p119 = scmp.ne.s32.totalorder %s108, %s111
      %p120 = scmp.eq.s32.totalorder %s22, 7
      %p121 = por %p119, %p120
      %p122 = scmp.ne.s32.totalorder %s111, %s112
      %p123 = scmp.eq.s32.totalorder %s22, 0
      %p124 = por %p122, %p123
      %p125 = scmp.ne.s32.totalorder %s111, %s112
      %p126 = scmp.eq.s32.totalorder %s23, 7
      %p127 = por %p125, %p126
      %p129 = scmp.ne.s32.totalorder %s112, %s128
      %p130 = scmp.eq.s32.totalorder %s23, 0
      %p131 = por %p129, %p130
      %p132 = scmp.le.s32.totalorder 1, %s17
      %p133 = scmp.lt.s32.totalorder %s17, 9
      %p134 = pnand %p132, %p133
      %p135 = pneg %p134
      // Predicated region
      $region9: #{tpu_custom_call.1} parent=5 // pred_check
        _
      $region10: #{tpu_custom_call.1} parent=5 // pred_check_branch
        %137 = sbr.rel (%p134) target = $region12
      $region11: #{tpu_custom_call.1} parent=5 // pred_region
        %s138 = ssub.s32 %s17, 1
      $region12: #{tpu_custom_call.1} parent=5 // pred_fallthru
        _
      %p139 = scmp.lt.s32.totalorder %s17, 8
      // Predicated region
      $region13: #{tpu_custom_call.1} parent=5 // pred_check
        %p140 = pneg %p139
      $region14: #{tpu_custom_call.1} parent=5 // pred_check_branch
        %142 = sbr.rel (%p140) target = $region16
      $region15: #{tpu_custom_call.1} parent=5 // pred_region
        // Predicated region
        $region17: #{tpu_custom_call.1} parent=15 // pred_check
          %p143 = pneg %p60
        $region18: #{tpu_custom_call.1} parent=15 // pred_check_branch
          %145 = sbr.rel (%p143) target = $region20
        $region19: #{tpu_custom_call.1} parent=15 // pred_region
          %s146 = sand.u32 %s50, 1
          %s147 = scalar_lea.sflag [#allocation3], %s146
          %s148 = sand.u32 %s50, 1
          %s149 = smul.addr %s148, 4
          %s150 = scalar_lea.vmem [#allocation2], %s149
          %s152 = ssub.s32 64, 64
          %153 = vsyncadd %s147, %s152
          %s154 = sadd.s32 %s26, %s25
          %s155 = smul.addr %s24, 4
          %s156 = sadd.s32 %s154, %s155
          %s157 = smul.addr %s156, 64
          %s158 = scalar_lea.hbm %s0, %s157
          %s160 = sshll.u32 %s150, 4
          %s161 = int_to_ptr.vmem [resolvable:$true] %s160
          %163 = dma.hbm_to_vmem [thread:$0]  %s158, 64, %s161, %s147
        $region20: #{tpu_custom_call.1} parent=15 // pred_fallthru
          _
        // Predicated region
        $region21: #{tpu_custom_call.1} parent=15 // pred_check
          %p164 = pneg %p88
        $region22: #{tpu_custom_call.1} parent=15 // pred_check_branch
          %166 = sbr.rel (%p164) target = $region24
        $region23: #{tpu_custom_call.1} parent=15 // pred_region
          %s167 = sand.u32 %s78, 1
          %s168 = scalar_lea.sflag [#allocation6], %s167
          %s169 = sand.u32 %s78, 1
          %s170 = smul.addr %s169, 2
          %s171 = scalar_lea.vmem [#allocation5], %s170
          %s173 = ssub.s32 32, 32
          %174 = vsyncadd %s168, %s173
          %s175 = sadd.s32 %s26, %s24
          %s176 = smul.addr %s175, 32
          %s177 = scalar_lea.hbm %s1, %s176
          %s179 = sshll.u32 %s171, 4
          %s180 = int_to_ptr.vmem [resolvable:$true] %s179
          %182 = dma.hbm_to_vmem [thread:$0]  %s177, 32, %s180, %s168
        $region24: #{tpu_custom_call.1} parent=15 // pred_fallthru
          _
      $region16: #{tpu_custom_call.1} parent=5 // pred_fallthru
        _
      %p183 = scmp.le.s32.totalorder 1, %s17
      %p184 = scmp.lt.s32.totalorder %s17, 9
      %p185 = pnand %p183, %p184
      %p186 = pneg %p185
      // Predicated region
      $region25: #{tpu_custom_call.1} parent=5 // pred_check
        _
      $region26: #{tpu_custom_call.1} parent=5 // pred_check_branch
        %188 = sbr.rel (%p185) target = $region28
      $region27: #{tpu_custom_call.1} parent=5 // pred_region
        %s189 = ssub.s32 %s17, 1
        %s190 = sand.u32 %s53, 1
        %s191 = scalar_lea.sflag [#allocation3], %s190
        %s192 = sand.u32 %s53, 1
        %s193 = smul.addr %s192, 4
        %s194 = scalar_lea.vmem [#allocation2], %s193
        // Predicated region
        $region29: #{tpu_custom_call.1} parent=27 // pred_check
          %p195 = pneg %p66
        $region30: #{tpu_custom_call.1} parent=27 // pred_check_branch
          %197 = sbr.rel (%p195) target = $region32
        $region31: #{tpu_custom_call.1} parent=27 // pred_region
          %198 = dma.done %s191, 64
        $region32: #{tpu_custom_call.1} parent=27 // pred_fallthru
          _
        %s199 = sand.u32 %s81, 1
        %s200 = scalar_lea.sflag [#allocation6], %s199
        %s201 = sand.u32 %s81, 1
        %s202 = smul.addr %s201, 2
        %s203 = scalar_lea.vmem [#allocation5], %s202
        // Predicated region
        $region33: #{tpu_custom_call.1} parent=27 // pred_check
          %p204 = pneg %p94
        $region34: #{tpu_custom_call.1} parent=27 // pred_check_branch
          %206 = sbr.rel (%p204) target = $region36
        $region35: #{tpu_custom_call.1} parent=27 // pred_region
          %207 = dma.done %s200, 32
        $region36: #{tpu_custom_call.1} parent=27 // pred_fallthru
          _
        %s208 = sand.u32 %s53, 1
        %s209 = scalar_lea.sflag [#allocation3], %s208
        %s210 = sand.u32 %s53, 1
        %s211 = smul.addr %s210, 4
        %s212 = scalar_lea.vmem [#allocation2], %s211
        %p213 = pneg %p66
        %p214 = pneg %p63
        %s215 = sand.u32 %s81, 1
        %s216 = scalar_lea.sflag [#allocation6], %s215
        %s217 = sand.u32 %s81, 1
        %s218 = smul.addr %s217, 2
        %s219 = scalar_lea.vmem [#allocation5], %s218
        %p220 = pneg %p94
        %p221 = pneg %p91
        %p222 = pneg %p124
        %p223 = pneg %p121
        %s224 = sand.u32 %s111, 1
        %s225 = scalar_lea.sflag [#allocation4], %s224
        %s226 = sand.u32 %s111, 1
        %s227 = smul.addr %s226, 4
        %s228 = scalar_lea.vmem [#allocation7], %s227
        %v231 = vld [vmem:[%s194] sm:$0xf]
        %v232 = vunpack.c.l.bf16 %v231
        %v233 = vmul.f32 %v232, 0.125
        %v234 = vld [vmem:[%s203] sm:$0x3]
        %vm235 = vnez %v234
        %v236 = vsel %vm235, 16843009, 0
        %v237 = vunpack.c.0.s8 %v236
        %vm238 = vcmp.ne.s32.totalorder %v237, 0
        %v239 = vsel %vm238, -10000.0, %v233
        %v240 = vlaneseq
        %v241 = vand.u32 %v240, 127
        %vm242 = vcmp.ge.s32.totalorder %v241, 32
        %v243 = vsel %vm242, -inf, %v239
        %244 = vmax.xlane.f32.xlu0 %v243
        %v245 = vpop.xlane.xlu0 %244
        %v246 = vsub.f32 %v243, %v245
        %v247 = vmul.f32 %v246, 1.442695
        %v248 = vpow.pop %v247
        %249 = vadd.xlane.f32.xlu0 %v248
        %v250 = vpop.xlane.xlu0 %249
        %v251 = vrcp.pop %v250
        %v252 = vmul.f32 %v248, %v251
        %v253 = vpack.c.bf16 %v252, %v252
        %254 = vst [vmem:[%s228] sm:$0xf] %v253
        %s255 = sand.u32 %s111, 1
        %s256 = scalar_lea.sflag [#allocation4], %s255
        %s257 = sand.u32 %s111, 1
        %s258 = smul.addr %s257, 4
        %s259 = scalar_lea.vmem [#allocation7], %s258
        // Predicated region
        $region37: #{tpu_custom_call.1} parent=27 // pred_check
          %p260 = pneg %p121
        $region38: #{tpu_custom_call.1} parent=27 // pred_check_branch
          %262 = sbr.rel (%p260) target = $region40
        $region39: #{tpu_custom_call.1} parent=27 // pred_region
          %s264 = ssub.s32 64, 64
          %265 = vsyncadd %s256, %s264
          %s266 = sadd.s32 %s29, %s28
          %s267 = smul.addr %s27, 4
          %s268 = sadd.s32 %s266, %s267
          %s269 = smul.addr %s268, 64
          %s270 = scalar_lea.hbm %s2, %s269
          %s272 = sshll.u32 %s259, 4
          %s273 = int_to_ptr.vmem [resolvable:$true] %s272
          %275 = dma.vmem_to_hbm [thread:$0]  %s273, 64, %s270, %s256
        $region40: #{tpu_custom_call.1} parent=27 // pred_fallthru
          _
      $region28: #{tpu_custom_call.1} parent=5 // pred_fallthru
        _
      %p276 = scmp.le.s32.totalorder 2, %s17
      // Predicated region
      $region41: #{tpu_custom_call.1} parent=5 // pred_check
        %p277 = pneg %p276
      $region42: #{tpu_custom_call.1} parent=5 // pred_check_branch
        %279 = sbr.rel (%p277) target = $region44
      $region43: #{tpu_custom_call.1} parent=5 // pred_region
        %s280 = ssub.s32 %s17, 2
        // Predicated region
        $region45: #{tpu_custom_call.1} parent=43 // pred_check
          %p281 = pneg %p127
        $region46: #{tpu_custom_call.1} parent=43 // pred_check_branch
          %283 = sbr.rel (%p281) target = $region48
        $region47: #{tpu_custom_call.1} parent=43 // pred_region
          %s284 = sand.u32 %s112, 1
          %s285 = scalar_lea.sflag [#allocation4], %s284
          %s286 = sand.u32 %s112, 1
          %s287 = smul.addr %s286, 4
          %s288 = scalar_lea.vmem [#allocation7], %s287
          %289 = dma.done %s285, 64
        $region48: #{tpu_custom_call.1} parent=43 // pred_fallthru
          _
      $region44: #{tpu_custom_call.1} parent=5 // pred_fallthru
        _
    $region6: #{tpu_custom_call.1} parent=1 // loop_footer
      %s21 = sadd.s32 1, %s17
    $region7: #{tpu_custom_call.1} parent=1 // loop_footer_branch
      %16 = sbr.rel target = $region3
    $region8: #{tpu_custom_call.1} parent=1 // loop_exit
      _
    %290 = vsyncpa [#allocation3], 1
    %s291 = scalar_lea.sflag [#allocation3], 1
    %292 = vsyncpa %s291, 1
    %293 = vsyncpa [#allocation6], 1
    %s294 = scalar_lea.sflag [#allocation6], 1
    %295 = vsyncpa %s294, 1
    %296 = vsyncpa [#allocation4], 1
    %s297 = scalar_lea.sflag [#allocation4], 1
    %298 = vsyncpa %s297, 1

</llo_original>
